<compile_context>
chip_gen: v6e
topology: v6e:2x2x1
jax: 0.10.0
libtpu: 0.0.40
codegen_flags: <defaults>
</compile_context>

<pallas_src>
import math
from functools import partial

import jax
import jax.numpy as jnp
from jax.experimental import pallas as pl
from jax.experimental.pallas import tpu as pltpu

_LANE = 128
_SUB = 8
_DEFAULT_BLOCK_ROWS = 8192             # (8192, 128) f32 tile = 4 MiB
_DEFAULT_SINGLE_PASS_BYTES = 8 << 20   # in + out <= 8 MiB -> single fused kernel
_VMEM_LIMIT_BYTES = 32 << 20


def _cdiv(a, b):
    return -(-a // b)


def _round_up(x, m):
    return _cdiv(x, m) * m


def _nonnull_mask(t, null_val, null_is_nan):
    """0/1 f32 mask of non-null entries, comparing in the input's native dtype."""
    if null_is_nan:
        keep = ~jnp.isnan(t)
    else:
        keep = t != jnp.asarray(null_val, dtype=t.dtype)
    return keep.astype(jnp.float32)


def _scale_offset(total, n):
    """Scalars reproducing the reference: out = mask*scale + offset.

    nonzero mask : scale = 1/(mean+1e-10), offset = 0
    all-zero mask: scale = 0,              offset = 1   (== torch.ones_like)
    """
    nonzero = total > jnp.float32(0.0)
    mean = total / jnp.float32(n)
    scale = jnp.where(nonzero, jnp.float32(1.0) / (mean + jnp.float32(1e-10)),
                      jnp.float32(0.0))
    offset = jnp.where(nonzero, jnp.float32(0.0), jnp.float32(1.0))
    return scale, offset


# ---------------------------------------------------------------------------
# Kernels
# ---------------------------------------------------------------------------

def _fused_kernel(t_ref, o_ref, *, null_val, null_is_nan, n):
    """Single-pass fast path: whole slab resident in VMEM, read target once."""
    mask = _nonnull_mask(t_ref[...], null_val, null_is_nan)
    total = jnp.sum(mask)                         # pad elems are null -> contribute 0
    scale, offset = _scale_offset(total, n)
    o_ref[...] = mask * scale + offset


def _partial_sum_kernel(t_ref, psum_ref, *, null_val, null_is_nan,
                        rows, block_rows, tiles_per_split, need_tail):
    """Pass 1: per-split (8, 128) partial sums of the non-null mask."""
    s = pl.program_id(0)          # parallel split axis (megacore-shardable)
    i = pl.program_id(1)          # arbitrary reduction axis

    @pl.when(i == 0)
    def _():
        psum_ref[...] = jnp.zeros_like(psum_ref)

    mask = _nonnull_mask(t_ref[...], null_val, null_is_nan)

    def _accumulate(m):
        colsum = jnp.sum(m, axis=0, keepdims=True)                    # (1, 128)
        r8 = jax.lax.broadcasted_iota(jnp.int32, (_SUB, _LANE), 0)
        psum_ref[...] += jnp.where(r8 == 0, colsum, jnp.float32(0.0))  # row 0 only

    if need_tail:
        # Tail / overflow tiles: mask rows beyond the true row count (their VMEM
        # contents are undefined for partial blocks).
        row0 = (s * tiles_per_split + i) * block_rows
        is_edge = row0 + block_rows > rows

        @pl.when(is_edge)
        def _():
            r = jax.lax.broadcasted_iota(jnp.int32, mask.shape, 0) + row0
            _accumulate(jnp.where(r < rows, mask, jnp.float32(0.0)))

        @pl.when(jnp.logical_not(is_edge))
        def _():
            _accumulate(mask)
    else:
        _accumulate(mask)


def _scale_kernel(sums_ref, t_ref, o_ref, *, null_val, null_is_nan, n):
    """Pass 2: out = mask * scale + offset; scalar finalize fused in-kernel."""
    total = jnp.sum(sums_ref[...])
    scale, offset = _scale_offset(total, n)
    mask = _nonnull_mask(t_ref[...], null_val, null_is_nan)
    o_ref[...] = mask * scale + offset


# ---------------------------------------------------------------------------
# Wrapper
# ---------------------------------------------------------------------------

class MaskedLossPallas:
    """Pallas port of the MaskedLoss base class (mask computation)."""

    def __init__(self, null_val=0.0, block_rows=_DEFAULT_BLOCK_ROWS,
                 single_pass_limit_bytes=_DEFAULT_SINGLE_PASS_BYTES):
        self.null_val = null_val
        self.block_rows = block_rows
        self.single_pass_limit_bytes = single_pass_limit_bytes

    def get_mask(self, target):
        null_is_nan = isinstance(self.null_val, float) and math.isnan(self.null_val)
        null_val = float(self.null_val)
        orig_shape = target.shape

        if null_is_nan and not jnp.issubdtype(target.dtype, jnp.floating):
            target = target.astype(jnp.float32)   # NaN-null only meaningful on floats

        flat = target.reshape(-1)                 # metadata-only for contiguous input
        n = flat.shape[0]
        rows = _cdiv(n, _LANE)
        padded_n = rows * _LANE
        aligned = padded_n == n
        if not aligned:
            # TODO(synk): a copy is unavoidable when n % 128 != 0; pad with the null
            # value so the padding contributes 0 to the mask sum.
            pad_val = float("nan") if null_is_nan else null_val
            flat = jnp.pad(flat, (0, padded_n - n), constant_values=pad_val)
        x2d = flat.reshape(rows, _LANE)           # lane-dense view (free when aligned)

        kern_kwargs = dict(null_val=null_val, null_is_nan=null_is_nan)
        in_bytes = padded_n * x2d.dtype.itemsize
        out_bytes = padded_n * 4

        if in_bytes + out_bytes <= self.single_pass_limit_bytes:
            # ---- single-pass fast path: read target once ----
            mask2d = pl.pallas_call(
                partial(_fused_kernel, n=n, **kern_kwargs),
                out_shape=jax.ShapeDtypeStruct((rows, _LANE), jnp.float32),
                grid_spec=pltpu.PrefetchScalarGridSpec(
                    num_scalar_prefetch=0,
                    grid=(1,),
                    in_specs=[pl.BlockSpec((rows, _LANE), lambda i: (0, 0))],
                    out_specs=pl.BlockSpec((rows, _LANE), lambda i: (0, 0)),
                ),
                compiler_params=pltpu.CompilerParams(
                    dimension_semantics=("arbitrary",),
                    vmem_limit_bytes=_VMEM_LIMIT_BYTES),
                cost_estimate=pl.CostEstimate(
                    flops=4 * padded_n, transcendentals=0,
                    bytes_accessed=in_bytes + out_bytes),
            )(x2d)
        else:
            # ---- two-pass streaming path ----
            block_rows = self.block_rows
            if rows <= block_rows:
                block_rows = rows                              # block == full dim
            else:
                block_rows = _round_up(min(block_rows, rows), _SUB)
            tiles = _cdiv(rows, block_rows)
            n_split = 2 if tiles >= 2 else 1                   # megacore split (v7x)
            tiles_per_split = _cdiv(tiles, n_split)
            covered_rows = n_split * tiles_per_split * block_rows
            need_tail = covered_rows > rows
            last_tile = tiles - 1

            # pass 1: per-split lane sums of the non-null mask
            lane_sums = pl.pallas_call(
                partial(_partial_sum_kernel, rows=rows, block_rows=block_rows,
                        tiles_per_split=tiles_per_split, need_tail=need_tail,
                        **kern_kwargs),
                out_shape=jax.ShapeDtypeStruct((n_split * _SUB, _LANE), jnp.float32),
                grid_spec=pltpu.PrefetchScalarGridSpec(
                    num_scalar_prefetch=0,
                    grid=(n_split, tiles_per_split),
                    in_specs=[pl.BlockSpec(
                        (block_rows, _LANE),
                        lambda s, i: (jnp.minimum(s * tiles_per_split + i,
                                                  last_tile), 0))],
                    out_specs=pl.BlockSpec((_SUB, _LANE), lambda s, i: (s, 0)),
                ),
                compiler_params=pltpu.CompilerParams(
                    dimension_semantics=("parallel", "arbitrary"),
                    vmem_limit_bytes=_VMEM_LIMIT_BYTES),
                cost_estimate=pl.CostEstimate(
                    flops=2 * padded_n, transcendentals=0,
                    bytes_accessed=in_bytes + n_split * _SUB * _LANE * 4),
            )(x2d)

            # pass 2: normalize; scalar finalize fused in-kernel, fully parallel
            mask2d = pl.pallas_call(
                partial(_scale_kernel, n=n, **kern_kwargs),
                out_shape=jax.ShapeDtypeStruct((rows, _LANE), jnp.float32),
                grid_spec=pltpu.PrefetchScalarGridSpec(
                    num_scalar_prefetch=0,
                    grid=(tiles,),
                    in_specs=[
                        pl.BlockSpec((n_split * _SUB, _LANE), lambda i: (0, 0)),
                        pl.BlockSpec((block_rows, _LANE), lambda i: (i, 0)),
                    ],
                    out_specs=pl.BlockSpec((block_rows, _LANE), lambda i: (i, 0)),
                ),
                compiler_params=pltpu.CompilerParams(
                    dimension_semantics=("parallel",),
                    vmem_limit_bytes=_VMEM_LIMIT_BYTES),
                cost_estimate=pl.CostEstimate(
                    flops=4 * padded_n, transcendentals=0,
                    bytes_accessed=in_bytes + out_bytes + n_split * _SUB * _LANE * 4),
            )(lane_sums, x2d)

        mask = mask2d.reshape(-1)
        if not aligned:
            mask = mask[:n]                       # copy only when n % 128 != 0
        # TODO(synk): the reference prints a warning when the mask is all zeros;
        # only the value semantics (ones_like) are reproduced here.
        return mask.reshape(orig_shape)

    def __call__(self, preds, target):
        # Base class forward is abstract in the reference implementation.
        raise NotImplementedError("Subclasses should implement this method.")


# ---------------------------------------------------------------------------
# Self-test
# ---------------------------------------------------------------------------

if __name__ == "__main__":
    key = jax.random.PRNGKey(0)
    k1, k2, k3, k4 = jax.random.split(key, 4)

    def ref_mask(target, null_val):
        # Mirrors the PyTorch _get_mask math in plain JAX.
        if isinstance(null_val, float) and math.isnan(null_val):
            m = (~jnp.isnan(target)).astype(jnp.float32)
        else:
            m = (target != null_val).astype(jnp.float32)
        return jnp.where(jnp.sum(m) == 0,
                         jnp.ones_like(m),
                         m / (jnp.mean(m) + 1e-10))

    # 1) NCHW f32 input with ~30% nulls — single-pass fast path.
    target = jax.random.normal(k1, (2, 4, 16, 16), dtype=jnp.float32)
    target = jnp.where(jax.random.bernoulli(k2, 0.3, target.shape), 0.0, target)
    mask = MaskedLossPallas(null_val=0.0).get_mask(target)
    jax.block_until_ready(mask)
    assert mask.shape == target.shape
    assert jnp.allclose(mask, ref_mask(target, 0.0), rtol=1e-5, atol=1e-5)

    # 2) Forced two-pass: 2-way split + partial tail tile (rows=15, block_rows=8).
    tgt_tail = jax.random.normal(k3, (3, 5, 16, 8), dtype=jnp.float32)
    tgt_tail = jnp.where(jax.random.bernoulli(k2, 0.4, tgt_tail.shape), 0.0, tgt_tail)
    mask_tail = MaskedLossPallas(null_val=0.0, block_rows=8,
                                 single_pass_limit_bytes=0).get_mask(tgt_tail)
    jax.block_until_ready(mask_tail)
    assert jnp.allclose(mask_tail, ref_mask(tgt_tail, 0.0), rtol=1e-5, atol=1e-5)

    # 3) bf16 target through the two-pass path (native-dtype compare, no upcast).
    tgt_bf16 = target.astype(jnp.bfloat16)
    mask_bf16 = MaskedLossPallas(null_val=0.0, block_rows=8,
                                 single_pass_limit_bytes=0).get_mask(tgt_bf16)
    assert jnp.allclose(mask_bf16, ref_mask(tgt_bf16, 0.0), rtol=1e-5, atol=1e-5)

    # 4) Element count not a multiple of 128 (210 elems) — padded, fast path.
    tgt_odd = jax.random.normal(k4, (2, 3, 5, 7), dtype=jnp.float32)
    tgt_odd = tgt_odd.at[0, 0, 0, 0].set(0.0)
    mask_odd = MaskedLossPallas(null_val=0.0).get_mask(tgt_odd)
    assert mask_odd.shape == tgt_odd.shape
    assert jnp.allclose(mask_odd, ref_mask(tgt_odd, 0.0), rtol=1e-5, atol=1e-5)

    # 4b) Same odd size forced through the two-pass path.
    mask_odd2 = MaskedLossPallas(null_val=0.0,
                                 single_pass_limit_bytes=0).get_mask(tgt_odd)
    assert jnp.allclose(mask_odd2, ref_mask(tgt_odd, 0.0), rtol=1e-5, atol=1e-5)

    # 5) NaN-null path.
    tgt_nan = jnp.where(jax.random.bernoulli(k2, 0.25, target.shape), jnp.nan, target)
    mask_nan = MaskedLossPallas(null_val=float("nan")).get_mask(tgt_nan)
    assert jnp.allclose(mask_nan, ref_mask(tgt_nan, float("nan")), rtol=1e-5, atol=1e-5)

    # 6) All-null fallback returns ones (reference's warning branch).
    mask_ones = MaskedLossPallas(null_val=0.0).get_mask(
        jnp.zeros((2, 4, 16, 16), jnp.float32))
    assert jnp.allclose(mask_ones, 1.0)

    print("KERNEL_OK")
</pallas_src>

<mosaic_0001>
module attributes {stable_mosaic.version = 11 : i64} {
  func.func @_fused_kernel(%arg0: i32, %arg1: memref<16x128xf32, #tpu.memory_space<vmem>>, %arg2: memref<16x128xf32, #tpu.memory_space<vmem>>) attributes {dimension_semantics = [#tpu.dimension_semantics<arbitrary>], iteration_bounds = array<i64: 1>, scalar_prefetch = 0 : i64, scratch_operands = 0 : i64, tpu.core_type = #tpu.core_type<tc>, window_params = [{pipeline_mode = #tpu.pipeline_mode<synchronous>, transform_indices = @transform_0, window_bounds = array<i64: 16, 128>}, {pipeline_mode = #tpu.pipeline_mode<synchronous>, transform_indices = @transform_1, window_bounds = array<i64: 16, 128>}]} {
    %c0 = arith.constant 0 : index
    %c0_0 = arith.constant 0 : index
    %0 = vector.load %arg1[%c0, %c0_0] : memref<16x128xf32, #tpu.memory_space<vmem>>, vector<16x128xf32>
    %cst = arith.constant 0.000000e+00 : f32
    %1 = vector.broadcast %cst : f32 to vector<16x128xf32>
    %2 = arith.cmpf one, %0, %1 : vector<16x128xf32>
    %3 = arith.extui %2 : vector<16x128xi1> to vector<16x128xi32>
    %4 = arith.sitofp %3 : vector<16x128xi32> to vector<16x128xf32>
    %5 = vector.shape_cast %4 : vector<16x128xf32> to vector<1x16x128xf32>
    %cst_1 = arith.constant dense<0.000000e+00> : vector<1xf32>
    %6 = vector.multi_reduction <add>, %5, %cst_1 [1, 2] : vector<1x16x128xf32> to vector<1xf32>
    %7 = vector.shape_cast %6 : vector<1xf32> to vector<1x1x1xf32>
    %8 = vector.extract %7[0, 0, 0] : f32 from vector<1x1x1xf32>
    %cst_2 = arith.constant 0.000000e+00 : f32
    %9 = arith.cmpf ogt, %8, %cst_2 : f32
    %cst_3 = arith.constant 2.048000e+03 : f32
    %10 = arith.divf %8, %cst_3 : f32
    %cst_4 = arith.constant 1.000000e-10 : f32
    %11 = arith.addf %10, %cst_4 : f32
    %cst_5 = arith.constant 1.000000e+00 : f32
    %12 = arith.divf %cst_5, %11 : f32
    %cst_6 = arith.constant 0.000000e+00 : f32
    %13 = arith.select %9, %12, %cst_6 : f32
    %cst_7 = arith.constant 0.000000e+00 : f32
    %cst_8 = arith.constant 1.000000e+00 : f32
    %14 = arith.select %9, %cst_7, %cst_8 : f32
    %15 = vector.broadcast %13 : f32 to vector<16x128xf32>
    %16 = arith.mulf %4, %15 : vector<16x128xf32>
    %17 = vector.broadcast %14 : f32 to vector<16x128xf32>
    %18 = arith.addf %16, %17 : vector<16x128xf32>
    %c0_9 = arith.constant 0 : index
    %c0_10 = arith.constant 0 : index
    %19 = vector.load %arg2[%c0_9, %c0_10] : memref<16x128xf32, #tpu.memory_space<vmem>>, vector<16x128xf32>
    tpu.vector_store %arg2[%c0_9, %c0_10], %18 {strides = array<i32>} : memref<16x128xf32, #tpu.memory_space<vmem>>, vector<16x128xf32>,
    return
  }
  func.func @transform_0(%arg0: i32) -> (i32, i32) {
    %c0_i32 = arith.constant 0 : i32
    %c0_i32_0 = arith.constant 0 : i32
    %c0_i32_1 = arith.constant 0 : i32
    return %c0_i32, %c0_i32_0 : i32, i32
  }
  func.func @transform_1(%arg0: i32) -> (i32, i32) {
    %c0_i32 = arith.constant 0 : i32
    %c0_i32_0 = arith.constant 0 : i32
    %c0_i32_1 = arith.constant 0 : i32
    return %c0_i32, %c0_i32_0 : i32, i32
  }
}

</mosaic_0001>

<llo_original>
// kernel: tpu_custom_call.1
$region0: #{tpu_custom_call.1}
  #allocation0 [shape = 'u32[]', space=smem, size = 0x4, offset = 0x4, fixed_abs, tag = 'smem constant byte address 0x4 - core index']
  #allocation1 [shape = 'u32[144,128]{1,0:T(1,128)}', space=vmem, size = 0x12000, scoped, tag = 'internal scratch']
  %s0 = inlined_call_operand.hbm [shape: f32[16,128], index: 0, kind: input, shape index: {}]
  %s1 = inlined_call_operand.hbm [shape: f32[16,128], index: 1, kind: output, shape index: {}]
  %s2 = sld [smem:[#allocation0]]
  $region18: #{tpu_custom_call.1} parent=0
    _
  %s4 = ssub.s32 1, %s2
  %s5 = scalar_select 0, %s4, %s2
  $region1: #{tpu_custom_call.1} parent=0
    #allocation2 [shape = 'u8[8192]{0}', space=vmem, size = 0x2000, scoped, tag = 'input window, operand 0, single buffered']
    #allocation3 [shape = 's32[1]{0}', space=sflag, size = 0x4, scoped, tag = 'scoped memory for tpu_custom_call.1']
    #allocation4 [shape = 's32[1]{0}', space=sflag, size = 0x4, scoped, tag = 'scoped memory for tpu_custom_call.1']
    #allocation5 [shape = 'u8[8192]{0}', space=vmem, size = 0x2000, scoped, tag = 'output window, operand 0, single buffered']
    %6 = vsyncpa [#allocation3], 0
    %7 = vsyncpa [#allocation4], 0
    // Predicated region
    $region2: #{tpu_custom_call.1} parent=1 // pred_check
      _
    $region3: #{tpu_custom_call.1} parent=1 // pred_check_branch
      %9 = sbr.rel (0) target = $region5
    $region4: #{tpu_custom_call.1} parent=1 // pred_region
      %s11 = ssub.s32 256, 256
      %12 = vsyncadd [#allocation3], %s11
      %s13 = sshll.u32 [#allocation2], 4
      %s14 = int_to_ptr.vmem [resolvable:$true] %s13
      %19 = dma.hbm_to_vmem [thread:$0]  %s0, 256, %s14, [#allocation3], 128, 128, 8
    $region5: #{tpu_custom_call.1} parent=1 // pred_fallthru
      _
    // Predicated region
    $region6: #{tpu_custom_call.1} parent=1 // pred_check
      _
    $region7: #{tpu_custom_call.1} parent=1 // pred_check_branch
      %21 = sbr.rel (0) target = $region9
    $region8: #{tpu_custom_call.1} parent=1 // pred_region
      %22 = dma.done [#allocation3], 256
    $region9: #{tpu_custom_call.1} parent=1 // pred_fallthru
      _
    %v23 = vld [vmem:[#allocation2] sm:$0xff]
    %v24 = vld [vmem:[#allocation2 + $0x8] sm:$0xff]
    %vm25 = vcmp.ne.f32.partialorder %v23, 0.0
    %vm26 = vcmp.ne.f32.partialorder %v24, 0.0
    %v27 = vsel %vm25, 1, 0
    %v28 = vsel %vm26, 1, 0
    %v29 = vcvt.s32.f32 %v27
    %v30 = vcvt.s32.f32 %v28
    %v31 = vadd.f32 %v29, %v30
    %32 = vadd.xlane.f32.xlu0 %v31
    %v33 = vpop.xlane.xlu0 %32
    %v34 = vrot.slane %v33, 4
    %v35 = vadd.f32 %v33, %v34
    %v36 = vrot.slane %v35, 2
    %v37 = vadd.f32 %v35, %v36
    %v38 = vrot.slane %v37, 1
    %v39 = vadd.f32 %v37, %v38
    %s40 = vtos %v39
    %p41 = scmp.gt.f32.partialorder %s40, 0.0
    %v42 = vrcp.pop 2048.0
    %s43 = vtos %v42
    %s44 = smul.f32 %s40, %s43
    %s45 = sadd.f32 %s44, 1e-10
    %v46 = vstv %s45
    %v47 = vrcp.pop %v46
    %s48 = vtos %v47
    %s49 = scalar_select %p41, %s48, 0.0
    %s50 = scalar_select %p41, 0.0, 1.0
    %v51 = vstv %s49
    %v52 = vmul.f32 %v29, %v51
    %v53 = vmul.f32 %v30, %v51
    %v54 = vstv %s50
    %v55 = vadd.f32 %v52, %v54
    %v56 = vadd.f32 %v53, %v54
    %57 = vst [vmem:[#allocation5] sm:$0xff] %v55
    %58 = vst [vmem:[#allocation5 + $0x8] sm:$0xff] %v56
    // Predicated region
    $region10: #{tpu_custom_call.1} parent=1 // pred_check
      _
    $region11: #{tpu_custom_call.1} parent=1 // pred_check_branch
      %60 = sbr.rel (0) target = $region13
    $region12: #{tpu_custom_call.1} parent=1 // pred_region
      %s62 = ssub.s32 256, 256
      %63 = vsyncadd [#allocation4], %s62
      %s64 = sshll.u32 [#allocation5], 4
      %s65 = int_to_ptr.vmem [resolvable:$true] %s64
      %70 = dma.vmem_to_hbm [thread:$0]  %s65, 256, %s1, [#allocation4], 128, 128, 8
    $region13: #{tpu_custom_call.1} parent=1 // pred_fallthru
      _
    // Predicated region
    $region14: #{tpu_custom_call.1} parent=1 // pred_check
      _
    $region15: #{tpu_custom_call.1} parent=1 // pred_check_branch
      %72 = sbr.rel (0) target = $region17
    $region16: #{tpu_custom_call.1} parent=1 // pred_region
      %73 = dma.done [#allocation4], 256
    $region17: #{tpu_custom_call.1} parent=1 // pred_fallthru
      _
    %74 = vsyncpa [#allocation3], 1
    %75 = vsyncpa [#allocation4], 1

</llo_original>
